<compile_context>
chip_gen: v7x
topology: tpu7x:2x2x1
jax: 0.10.0
libtpu: 0.0.40
codegen_flags: <defaults>
</compile_context>

<pallas_src>
import functools

import jax
import jax.numpy as jnp
from jax.experimental import pallas as pl
from jax.experimental.pallas import tpu as pltpu


def _round_up(x, m):
    return ((x + m - 1) // m) * m


def _vmem_limit_bytes():
    """Scoped-VMEM limit per generation: ~3/4 of physical per-core VMEM, capped at
    64 MiB (v5e/v6e: 128 MiB physical -> 64 MiB; v7x: 64 MiB physical -> 48 MiB)."""
    phys = 64 * 1024 * 1024
    try:
        phys = int(pltpu.get_tpu_info().vmem_capacity_bytes)
    except Exception:
        pass
    return min((phys * 3) // 4, 64 * 1024 * 1024)


def _choose_tiling(B, C, T, in_itemsize, vmem_limit, max_tile_t=None):
    """Return (bb, tile_t, num_b, num_halves, num_t).

    Sizing targets:
      * per-step logits block up to ~8 MiB and total explicit working set
        (double-buffered inputs + accumulators + cached class iota + f32 temporaries)
        within ~half of vmem_limit,
      * fold batch rows (bb a divisor of B, <= ceil(B/2)) when C*T is small,
      * keep >= 2 blocks on the parallel grid axes (split T into two halves when
        B == 1) so both v7x TensorCores get work.
    """
    target_block_bytes = 8 * 1024 * 1024
    budget = vmem_limit // 2
    # bytes per (batch row, T column): logits x2 buffers + ~2 f32 compiler
    # temporaries per class + int32 targets x2 + two f32 lane accumulators.
    per_row_col = C * (2 * in_itemsize + 8) + 16
    per_col_shared = C * 4                       # cached class-iota (1, C, tile_t)

    def max_cols(rows):
        by_budget = budget // (rows * per_row_col + per_col_shared)
        by_block = target_block_bytes // max(1, rows * C * in_itemsize)
        cols = min(by_budget, by_block)
        if max_tile_t is not None:
            cols = min(cols, int(max_tile_t))
        return (cols // 128) * 128

    if max_cols(1) < 128:
        # TODO(synk): add a class-axis grid with an online (running max/sum)
        # logsumexp for vocabulary-scale C instead of rejecting.
        raise ValueError(
            f"MaskCrossEntropyLoss kernel: a (C={C}, 128) logits block (double-"
            f"buffered, plus scratch) does not fit vmem_limit_bytes={vmem_limit}.")

    t_cols = _round_up(T, 128)                   # lanes a full-T block occupies

    if B >= 2:
        num_halves = 1
        bb = 1
        # Largest divisor of B (<= ceil(B/2), so >= 2 batch blocks remain) whose
        # full-T block still fits the budget; else fall back to bb=1 and tile T.
        for cand in range((B + 1) // 2, 0, -1):
            if B % cand == 0 and max_cols(cand) >= t_cols:
                bb = cand
                break
        tile_t = T if max_cols(bb) >= t_cols else max_cols(bb)
    else:
        bb = 1
        if T > 128:
            # Split T into two independent "parallel" halves for v7x megacore.
            num_halves = 2
            tile_t = min(max_cols(1), _round_up(pl.cdiv(T, 2), 128))
        else:
            num_halves = 1
            tile_t = T if max_cols(1) >= t_cols else max_cols(1)

    num_t = pl.cdiv(pl.cdiv(T, tile_t), num_halves)   # t steps per half
    num_b = B // bb
    return bb, tile_t, num_b, num_halves, num_t


def _mask_ce_kernel(logits_ref, y_ref, sum_ref, cnt_ref, acc_sum, acc_cnt, cls_ref,
                    *, ignore_index, num_t):
    t = pl.program_id(2)

    @pl.when(t == 0)
    def _init():
        acc_sum[...] = jnp.zeros_like(acc_sum)
        acc_cnt[...] = jnp.zeros_like(acc_cnt)
        # Cache the class-index iota once per (batch-block, half); re-loaded from
        # VMEM on later steps instead of regenerating it (VPU relief on v7x).
        cls_ref[...] = jax.lax.broadcasted_iota(jnp.int32, cls_ref.shape, 1)

    logits = logits_ref[...].astype(jnp.float32)        # (bb, C, tile_t)
    y = y_ref[...]                                      # (bb, 1, tile_t) int32

    # Numerically stable log-sum-exp over the class (sublane) axis, fused with the
    # target-logit gather on the same `shifted` tensor.
    m = jnp.max(logits, axis=1, keepdims=True)          # (bb, 1, tile_t)
    shifted = logits - m
    sumexp = jnp.sum(jnp.exp(shifted), axis=1, keepdims=True)
    tgt = jnp.sum(jnp.where(cls_ref[...] == y, shifted, 0.0), axis=1, keepdims=True)
    loss = jnp.log(sumexp) - tgt                         # (bb, 1, tile_t)

    # Padded / out-of-bounds positions carry ignore_index in the (padded) targets,
    # so this is the only mask needed.  Keep *select* semantics: garbage logits in
    # OOB tails may be NaN/Inf and must never be multiplied into the accumulator.
    valid = y != ignore_index
    acc_sum[...] += jnp.where(valid, loss, 0.0)
    acc_cnt[...] += jnp.where(valid, 1.0, 0.0)

    @pl.when(t == num_t - 1)
    def _finalize():
        # One cross-lane reduce per (batch-block, half); lane-dense 128-wide store.
        s = jnp.sum(acc_sum[...])
        c = jnp.sum(acc_cnt[...])
        sum_ref[...] = jnp.full(sum_ref.shape, s, dtype=jnp.float32)
        cnt_ref[...] = jnp.full(cnt_ref.shape, c, dtype=jnp.float32)


def mask_cross_entropy_loss(yhat, y, ignore_index, *, max_tile_t=None):
    """yhat: (B, C, T) float (f32 or bf16) logits; y: (B, T) int targets.
    Returns scalar mean CE over positions where y != ignore_index (NaN if all
    ignored, matching torch).  `max_tile_t` is a testing hook to force tiling."""
    B, C, T = yhat.shape
    vmem_limit = _vmem_limit_bytes()
    bb, tile_t, num_b, num_halves, num_t = _choose_tiling(
        B, C, T, jnp.dtype(yhat.dtype).itemsize, vmem_limit, max_tile_t)

    # Lane-dense targets, padded along T with ignore_index so every target block is
    # in bounds and OOB / redundant logits columns are automatically excluded.
    # (int32 only — the large logits array is never copied or transposed in HBM.)
    t_pad = num_halves * num_t * tile_t
    targets = y.astype(jnp.int32).reshape(B, 1, T)
    if t_pad != T:
        targets = jnp.pad(targets, ((0, 0), (0, 0), (0, t_pad - T)),
                          constant_values=jnp.int32(ignore_index))

    t_blocks = pl.cdiv(T, tile_t)
    clamp_logits = num_halves * num_t > t_blocks

    def logits_t_index(h, t):
        idx = h * num_t + t
        if clamp_logits:
            # Never DMA a fully out-of-bounds logits block; the redundant re-read is
            # neutralized by the ignore_index-padded targets.
            idx = jnp.minimum(idx, t_blocks - 1)
        return idx

    kernel = functools.partial(_mask_ce_kernel,
                               ignore_index=int(ignore_index), num_t=num_t)

    part_sum, part_cnt = pl.pallas_call(
        kernel,
        out_shape=(
            jax.ShapeDtypeStruct((num_b, num_halves, 1, 128), jnp.float32),
            jax.ShapeDtypeStruct((num_b, num_halves, 1, 128), jnp.float32),
        ),
        grid_spec=pltpu.PrefetchScalarGridSpec(
            num_scalar_prefetch=0,
            grid=(num_b, num_halves, num_t),
            in_specs=[
                pl.BlockSpec((bb, C, tile_t),
                             lambda b, h, t: (b, 0, logits_t_index(h, t))),
                pl.BlockSpec((bb, 1, tile_t),
                             lambda b, h, t: (b, 0, h * num_t + t)),
            ],
            out_specs=(
                pl.BlockSpec((1, 1, 1, 128), lambda b, h, t: (b, h, 0, 0)),
                pl.BlockSpec((1, 1, 1, 128), lambda b, h, t: (b, h, 0, 0)),
            ),
            scratch_shapes=[
                pltpu.VMEM((bb, 1, tile_t), jnp.float32),   # per-lane loss partials
                pltpu.VMEM((bb, 1, tile_t), jnp.float32),   # per-lane valid counts
                pltpu.VMEM((1, C, tile_t), jnp.int32),      # cached class iota
            ],
        ),
        compiler_params=pltpu.CompilerParams(
            dimension_semantics=("parallel", "parallel", "arbitrary"),
            vmem_limit_bytes=int(vmem_limit),
        ),
    )(yhat, targets)

    total = jnp.sum(part_sum[:, :, 0, 0])
    count = jnp.sum(part_cnt[:, :, 0, 0])
    return total / count


def _reference(yhat, y, ignore_index):
    # pure-JAX reference mirroring the PyTorch module
    B, C, T = yhat.shape
    logits = jnp.transpose(yhat, (0, 2, 1)).reshape(-1, C).astype(jnp.float32)
    tgt = y.reshape(-1).astype(jnp.int32)
    logp = jax.nn.log_softmax(logits, axis=-1)
    nll = -jnp.take_along_axis(logp, jnp.clip(tgt, 0, C - 1)[:, None], axis=-1)[:, 0]
    mask = (tgt != ignore_index).astype(jnp.float32)
    return jnp.sum(nll * mask) / jnp.sum(mask)


if __name__ == "__main__":
    ignore_index = -1

    def run_case(case_id, B, C, T, max_tile_t=None):
        k1, k2, k3 = jax.random.split(
            jax.random.fold_in(jax.random.PRNGKey(0), case_id), 3)
        yhat = jax.random.normal(k1, (B, C, T), dtype=jnp.float32)
        y = jax.random.randint(k2, (B, T), 0, C, dtype=jnp.int32)
        ignore = jax.random.bernoulli(k3, 0.25, (B, T))   # ~25% ignored positions
        y = jnp.where(ignore, jnp.int32(ignore_index), y)

        loss = jax.block_until_ready(
            mask_cross_entropy_loss(yhat, y, ignore_index, max_tile_t=max_tile_t))
        ref = _reference(yhat, y, ignore_index)
        assert jnp.allclose(loss, ref, atol=1e-5, rtol=1e-5), (case_id, loss, ref)

    # Multi-tile T accumulation + ragged T tail (targets padded with ignore_index).
    run_case(0, B=2, C=10, T=200, max_tile_t=128)
    # B == 1: T split into two "parallel" halves (v7x megacore) + clamped tail block.
    run_case(1, B=1, C=10, T=300, max_tile_t=128)
    # Batch-row folding: Bb = 3 rows per block, 2 parallel batch blocks.
    run_case(2, B=6, C=10, T=256)

    print("KERNEL_OK")
</pallas_src>

<mosaic_0001>
module attributes {stable_mosaic.version = 11 : i64} {
  func.func @_mask_ce_kernel(%arg0: i32, %arg1: i32, %arg2: i32, %arg3: memref<1x10x128xf32, #tpu.memory_space<vmem>>, %arg4: memref<1x1x128xi32, #tpu.memory_space<vmem>>, %arg5: memref<1x1x1x128xf32, #tpu.memory_space<vmem>>, %arg6: memref<1x1x1x128xf32, #tpu.memory_space<vmem>>, %arg7: memref<1x1x128xf32, #tpu.memory_space<vmem>>, %arg8: memref<1x1x128xf32, #tpu.memory_space<vmem>>, %arg9: memref<1x10x128xi32, #tpu.memory_space<vmem>>) attributes {dimension_semantics = [#tpu.dimension_semantics<parallel>, #tpu.dimension_semantics<parallel>, #tpu.dimension_semantics<arbitrary>], iteration_bounds = array<i64: 2, 1, 2>, scalar_prefetch = 0 : i64, scratch_operands = 3 : i64, tpu.core_type = #tpu.core_type<tc>, window_params = [{transform_indices = @transform_0, window_bounds = array<i64: 1, 10, 128>}, {transform_indices = @transform_1, window_bounds = array<i64: 1, 1, 128>}, {transform_indices = @transform_2, window_bounds = array<i64: 1, 1, 1, 128>}, {transform_indices = @transform_3, window_bounds = array<i64: 1, 1, 1, 128>}]} {
    %c0_i32 = arith.constant 0 : i32
    %0 = arith.cmpi eq, %arg2, %c0_i32 : i32
    %1 = arith.extui %0 : i1 to i32
    %c0_i32_0 = arith.constant 0 : i32
    %2 = arith.cmpi ne, %1, %c0_i32_0 : i32
    scf.if %2 {
      %cst_28 = arith.constant 0.000000e+00 : f32
      %37 = vector.broadcast %cst_28 : f32 to vector<1x1x128xf32>
      %c0_29 = arith.constant 0 : index
      %c0_30 = arith.constant 0 : index
      %c0_31 = arith.constant 0 : index
      %38 = vector.load %arg7[%c0_29, %c0_30, %c0_31] : memref<1x1x128xf32, #tpu.memory_space<vmem>>, vector<1x1x128xf32>
      tpu.vector_store %arg7[%c0_29, %c0_30, %c0_31], %37 {strides = array<i32>} : memref<1x1x128xf32, #tpu.memory_space<vmem>>, vector<1x1x128xf32>,
      %cst_32 = arith.constant 0.000000e+00 : f32
      %39 = vector.broadcast %cst_32 : f32 to vector<1x1x128xf32>
      %c0_33 = arith.constant 0 : index
      %c0_34 = arith.constant 0 : index
      %c0_35 = arith.constant 0 : index
      %40 = vector.load %arg8[%c0_33, %c0_34, %c0_35] : memref<1x1x128xf32, #tpu.memory_space<vmem>>, vector<1x1x128xf32>
      tpu.vector_store %arg8[%c0_33, %c0_34, %c0_35], %39 {strides = array<i32>} : memref<1x1x128xf32, #tpu.memory_space<vmem>>, vector<1x1x128xf32>,
      %41 = tpu.iota {dimensions = array<i32: 1>} : vector<1x10x128xi32>
      %c0_36 = arith.constant 0 : index
      %c0_37 = arith.constant 0 : index
      %c0_38 = arith.constant 0 : index
      %42 = vector.load %arg9[%c0_36, %c0_37, %c0_38] : memref<1x10x128xi32, #tpu.memory_space<vmem>>, vector<1x10x128xi32>
      tpu.vector_store %arg9[%c0_36, %c0_37, %c0_38], %41 {strides = array<i32>} : memref<1x10x128xi32, #tpu.memory_space<vmem>>, vector<1x10x128xi32>,
    } else {
    }
    %c0 = arith.constant 0 : index
    %c0_1 = arith.constant 0 : index
    %c0_2 = arith.constant 0 : index
    %3 = vector.load %arg3[%c0, %c0_1, %c0_2] : memref<1x10x128xf32, #tpu.memory_space<vmem>>, vector<1x10x128xf32>
    %c0_3 = arith.constant 0 : index
    %c0_4 = arith.constant 0 : index
    %c0_5 = arith.constant 0 : index
    %4 = vector.load %arg4[%c0_3, %c0_4, %c0_5] : memref<1x1x128xi32, #tpu.memory_space<vmem>>, vector<1x1x128xi32>
    %cst = arith.constant dense<0xFF800000> : vector<1x128xf32>
    %5 = vector.multi_reduction <maximumf>, %3, %cst [1] : vector<1x10x128xf32> to vector<1x128xf32>
    %6 = vector.shape_cast %5 : vector<1x128xf32> to vector<1x1x128xf32>
    %7 = vector.broadcast %6 : vector<1x1x128xf32> to vector<1x10x128xf32>
    %8 = arith.subf %3, %7 : vector<1x10x128xf32>
    %9 = math.exp %8 : vector<1x10x128xf32>
    %cst_6 = arith.constant dense<0.000000e+00> : vector<1x128xf32>
    %10 = vector.multi_reduction <add>, %9, %cst_6 [1] : vector<1x10x128xf32> to vector<1x128xf32>
    %11 = vector.shape_cast %10 : vector<1x128xf32> to vector<1x1x128xf32>
    %c0_7 = arith.constant 0 : index
    %c0_8 = arith.constant 0 : index
    %c0_9 = arith.constant 0 : index
    %12 = vector.load %arg9[%c0_7, %c0_8, %c0_9] : memref<1x10x128xi32, #tpu.memory_space<vmem>>, vector<1x10x128xi32>
    %13 = vector.broadcast %4 : vector<1x1x128xi32> to vector<1x10x128xi32>
    %14 = arith.cmpi eq, %12, %13 : vector<1x10x128xi32>
    %cst_10 = arith.constant 0.000000e+00 : f32
    %15 = vector.broadcast %cst_10 : f32 to vector<1x10x128xf32>
    %16 = arith.select %14, %8, %15 : vector<1x10x128xi1>, vector<1x10x128xf32>
    %cst_11 = arith.constant dense<0.000000e+00> : vector<1x128xf32>
    %17 = vector.multi_reduction <add>, %16, %cst_11 [1] : vector<1x10x128xf32> to vector<1x128xf32>
    %18 = vector.shape_cast %17 : vector<1x128xf32> to vector<1x1x128xf32>
    %19 = math.log %11 : vector<1x1x128xf32>
    %20 = arith.subf %19, %18 : vector<1x1x128xf32>
    %c-1_i32 = arith.constant -1 : i32
    %21 = vector.broadcast %c-1_i32 : i32 to vector<1x1x128xi32>
    %22 = arith.cmpi ne, %4, %21 : vector<1x1x128xi32>
    %c0_12 = arith.constant 0 : index
    %c0_13 = arith.constant 0 : index
    %c0_14 = arith.constant 0 : index
    %23 = vector.load %arg7[%c0_12, %c0_13, %c0_14] : memref<1x1x128xf32, #tpu.memory_space<vmem>>, vector<1x1x128xf32>
    %cst_15 = arith.constant 0.000000e+00 : f32
    %24 = vector.broadcast %cst_15 : f32 to vector<1x1x128xf32>
    %25 = arith.select %22, %20, %24 : vector<1x1x128xi1>, vector<1x1x128xf32>
    %26 = arith.addf %23, %25 : vector<1x1x128xf32>
    %c0_16 = arith.constant 0 : index
    %c0_17 = arith.constant 0 : index
    %c0_18 = arith.constant 0 : index
    %27 = vector.load %arg7[%c0_16, %c0_17, %c0_18] : memref<1x1x128xf32, #tpu.memory_space<vmem>>, vector<1x1x128xf32>
    tpu.vector_store %arg7[%c0_16, %c0_17, %c0_18], %26 {strides = array<i32>} : memref<1x1x128xf32, #tpu.memory_space<vmem>>, vector<1x1x128xf32>,
    %c0_19 = arith.constant 0 : index
    %c0_20 = arith.constant 0 : index
    %c0_21 = arith.constant 0 : index
    %28 = vector.load %arg8[%c0_19, %c0_20, %c0_21] : memref<1x1x128xf32, #tpu.memory_space<vmem>>, vector<1x1x128xf32>
    %cst_22 = arith.constant 1.000000e+00 : f32
    %cst_23 = arith.constant 0.000000e+00 : f32
    %29 = vector.broadcast %cst_22 : f32 to vector<1x1x128xf32>
    %30 = vector.broadcast %cst_23 : f32 to vector<1x1x128xf32>
    %31 = arith.select %22, %29, %30 : vector<1x1x128xi1>, vector<1x1x128xf32>
    %32 = arith.addf %28, %31 : vector<1x1x128xf32>
    %c0_24 = arith.constant 0 : index
    %c0_25 = arith.constant 0 : index
    %c0_26 = arith.constant 0 : index
    %33 = vector.load %arg8[%c0_24, %c0_25, %c0_26] : memref<1x1x128xf32, #tpu.memory_space<vmem>>, vector<1x1x128xf32>
    tpu.vector_store %arg8[%c0_24, %c0_25, %c0_26], %32 {strides = array<i32>} : memref<1x1x128xf32, #tpu.memory_space<vmem>>, vector<1x1x128xf32>,
    %c1_i32 = arith.constant 1 : i32
    %34 = arith.cmpi eq, %arg2, %c1_i32 : i32
    %35 = arith.extui %34 : i1 to i32
    %c0_i32_27 = arith.constant 0 : i32
    %36 = arith.cmpi ne, %35, %c0_i32_27 : i32
    scf.if %36 {
      %c0_28 = arith.constant 0 : index
      %c0_29 = arith.constant 0 : index
      %c0_30 = arith.constant 0 : index
      %37 = vector.load %arg7[%c0_28, %c0_29, %c0_30] : memref<1x1x128xf32, #tpu.memory_space<vmem>>, vector<1x1x128xf32>
      %38 = vector.shape_cast %37 : vector<1x1x128xf32> to vector<1x1x1x128xf32>
      %cst_31 = arith.constant dense<0.000000e+00> : vector<1xf32>
      %39 = vector.multi_reduction <add>, %38, %cst_31 [1, 2, 3] : vector<1x1x1x128xf32> to vector<1xf32>
      %40 = vector.shape_cast %39 : vector<1xf32> to vector<1x1x1x1xf32>
      %41 = vector.extract %40[0, 0, 0, 0] : f32 from vector<1x1x1x1xf32>
      %c0_32 = arith.constant 0 : index
      %c0_33 = arith.constant 0 : index
      %c0_34 = arith.constant 0 : index
      %42 = vector.load %arg8[%c0_32, %c0_33, %c0_34] : memref<1x1x128xf32, #tpu.memory_space<vmem>>, vector<1x1x128xf32>
      %43 = vector.shape_cast %42 : vector<1x1x128xf32> to vector<1x1x1x128xf32>
      %cst_35 = arith.constant dense<0.000000e+00> : vector<1xf32>
      %44 = vector.multi_reduction <add>, %43, %cst_35 [1, 2, 3] : vector<1x1x1x128xf32> to vector<1xf32>
      %45 = vector.shape_cast %44 : vector<1xf32> to vector<1x1x1x1xf32>
      %46 = vector.extract %45[0, 0, 0, 0] : f32 from vector<1x1x1x1xf32>
      %47 = vector.broadcast %41 : f32 to vector<1x1x1x128xf32>
      %c0_36 = arith.constant 0 : index
      %c0_37 = arith.constant 0 : index
      %c0_38 = arith.constant 0 : index
      %c0_39 = arith.constant 0 : index
      %48 = vector.load %arg5[%c0_36, %c0_37, %c0_38, %c0_39] : memref<1x1x1x128xf32, #tpu.memory_space<vmem>>, vector<1x1x1x128xf32>
      tpu.vector_store %arg5[%c0_36, %c0_37, %c0_38, %c0_39], %47 {strides = array<i32>} : memref<1x1x1x128xf32, #tpu.memory_space<vmem>>, vector<1x1x1x128xf32>,
      %49 = vector.broadcast %46 : f32 to vector<1x1x1x128xf32>
      %c0_40 = arith.constant 0 : index
      %c0_41 = arith.constant 0 : index
      %c0_42 = arith.constant 0 : index
      %c0_43 = arith.constant 0 : index
      %50 = vector.load %arg6[%c0_40, %c0_41, %c0_42, %c0_43] : memref<1x1x1x128xf32, #tpu.memory_space<vmem>>, vector<1x1x1x128xf32>
      tpu.vector_store %arg6[%c0_40, %c0_41, %c0_42, %c0_43], %49 {strides = array<i32>} : memref<1x1x1x128xf32, #tpu.memory_space<vmem>>, vector<1x1x1x128xf32>,
    } else {
    }
    return
  }
  func.func @transform_0(%arg0: i32, %arg1: i32, %arg2: i32) -> (i32, i32, i32) {
    %c2_i32 = arith.constant 2 : i32
    %0 = arith.muli %arg1, %c2_i32 : i32
    %1 = arith.addi %0, %arg2 : i32
    %c0_i32 = arith.constant 0 : i32
    %c0_i32_0 = arith.constant 0 : i32
    return %arg0, %c0_i32, %1 : i32, i32, i32
  }
  func.func @transform_1(%arg0: i32, %arg1: i32, %arg2: i32) -> (i32, i32, i32) {
    %c2_i32 = arith.constant 2 : i32
    %0 = arith.muli %arg1, %c2_i32 : i32
    %1 = arith.addi %0, %arg2 : i32
    %c0_i32 = arith.constant 0 : i32
    %c0_i32_0 = arith.constant 0 : i32
    return %arg0, %c0_i32, %1 : i32, i32, i32
  }
  func.func @transform_2(%arg0: i32, %arg1: i32, %arg2: i32) -> (i32, i32, i32, i32) {
    %c0_i32 = arith.constant 0 : i32
    %c0_i32_0 = arith.constant 0 : i32
    %c0_i32_1 = arith.constant 0 : i32
    return %arg0, %arg1, %c0_i32, %c0_i32_0 : i32, i32, i32, i32
  }
  func.func @transform_3(%arg0: i32, %arg1: i32, %arg2: i32) -> (i32, i32, i32, i32) {
    %c0_i32 = arith.constant 0 : i32
    %c0_i32_0 = arith.constant 0 : i32
    %c0_i32_1 = arith.constant 0 : i32
    return %arg0, %arg1, %c0_i32, %c0_i32_0 : i32, i32, i32, i32
  }
}

</mosaic_0001>

<llo_original>
// kernel: tpu_custom_call.1
$region0: #{tpu_custom_call.1}
  #allocation0 [shape = 'u32[]', space=smem, size = 0x4, offset = 0x4, fixed_abs, tag = 'smem constant byte address 0x4 - core index']
  #allocation1 [shape = 'u32[144,128]{1,0:T(1,128)}', space=vmem, size = 0x12000, scoped, tag = 'internal scratch']
  #allocation2 [shape = 'f32[1,1,128]{2,1,0:T(1,128)}', space=vmem, size = 0x200, scoped, tag = 'scratch operand']
  #allocation3 [shape = 'f32[1,1,128]{2,1,0:T(1,128)}', space=vmem, size = 0x200, scoped, tag = 'scratch operand']
  #allocation4 [shape = 's32[1,10,128]{2,1,0:T(8,128)}', space=vmem, size = 0x2000, scoped, tag = 'scratch operand']
  %s0 = inlined_call_operand.vmem [shape: f32[2,10,200], index: 0, kind: input, shape index: {}]
  %s1 = inlined_call_operand.vmem [shape: s32[2,1,256], index: 1, kind: input, shape index: {}]
  %s2 = inlined_call_operand.hbm [shape: f32[2,1,1,128], index: 2, kind: output, shape index: {0}]
  %s3 = inlined_call_operand.hbm [shape: f32[2,1,1,128], index: 3, kind: output, shape index: {1}]
  %4 = xla_tuple %s2, %s3
  %s5 = sld [smem:[#allocation0]]
  $region95: #{tpu_custom_call.1} parent=0
    _
  %s7 = ssub.s32 1, %s5
  %s8 = scalar_select 0, %s7, %s5
  $region1: #{tpu_custom_call.1} parent=0
    #allocation5 [shape = 'u8[16384]{0}', space=vmem, size = 0x4000, scoped, tag = 'input window, operand 0']
    #allocation6 [shape = 'u8[1024]{0}', space=vmem, size = 0x400, scoped, tag = 'output window, operand 0']
    #allocation7 [shape = 's32[2]{0}', space=sflag, size = 0x8, scoped, tag = 'scoped memory for tpu_custom_call.1']
    #allocation8 [shape = 'u8[1024]{0}', space=vmem, size = 0x400, scoped, tag = 'output window, operand 1']
    #allocation9 [shape = 's32[2]{0}', space=sflag, size = 0x8, scoped, tag = 'scoped memory for tpu_custom_call.1']
    %9 = vsyncpa [#allocation7], 0
    %s10 = scalar_lea.sflag [#allocation7], 1
    %11 = vsyncpa %s10, 0
    %12 = vsyncpa [#allocation9], 0
    %s13 = scalar_lea.sflag [#allocation9], 1
    %14 = vsyncpa %s13, 0
    loop: start=0, step=1, limit=6
    $region2: #{tpu_custom_call.1} parent=1 // loop_pre_header
      _
    $region3: #{tpu_custom_call.1} parent=1 // loop_header
      %s16 = sphi 0, %s20
      %p17 = scmp.ge.s32.totalorder %s16, 6
      %s23 = sphi 0, %s42
      %s24 = sphi 0, %s38
      %s25 = sphi 0, %s34
      %s26 = sphi 0, %s23
      %s27 = sphi 0, %s24
      %s28 = sphi 0, %s25
      %s29 = sphi 0, %s26
      %s30 = sphi 0, %s27
      %s31 = sphi 0, %s28
      %s51 = sphi 0, %s53
      %s54 = sphi 0, %s51
      %s55 = sphi 0, %s54
      %s71 = sphi 0, %s55
      %s83 = sphi 0, %s85
      %s86 = sphi 0, %s83
      %s87 = sphi 0, %s86
      %s103 = sphi 0, %s87
      %s111 = sphi 0, %s113
      %s114 = sphi 0, %s111
      %s115 = sphi 0, %s114
      %s131 = sphi 0, %s115
      %s139 = sphi 0, %s141
      %s142 = sphi 0, %s139
      %s143 = sphi 0, %s142
      %s159 = sphi 0, %s143
    $region4: #{tpu_custom_call.1} parent=1 // loop_header_branch
      %19 = sbr.rel (%p17) target = $region8
    $region5: #{tpu_custom_call.1} parent=1 // loop_body
      %s21 = ssub.s32 %s16, 1
      %s22 = ssub.s32 %s16, 2
      %s32 = sadd.s32 1, %s25
      %p33 = scmp.ge.s32.totalorder %s32, 2
      %s34 = scalar_select %p33, 0, %s32
      %s35 = sadd.s32 1, %s24
      %s36 = scalar_select %p33, %s35, %s24
      %p37 = scmp.ge.s32.totalorder %s36, 1
      %s38 = scalar_select %p37, 0, %s36
      %s39 = sadd.s32 1, %s23
      %s40 = scalar_select %p37, %s39, %s23
      %p41 = scmp.ge.s32.totalorder %s40, 2
      %s42 = scalar_select %p41, 0, %s40
      %s43 = smul.u32 %s24, 2
      %s44 = sadd.s32 %s43, %s25
      %s45 = smul.u32 %s38, 2
      %s46 = sadd.s32 %s45, %s34
      %s47 = ssub.s32 %s23, %s42
      %s48 = ssub.s32 %s44, %s46
      %s49 = sor.u32 %s47, %s48
      %p50 = scmp.eq.s32.totalorder %s49, 0
      %s52 = sadd.s32 %s51, 1
      %s53 = scalar_select %p50, %s51, %s52
      %p56 = pneg %p50
      %p57 = scmp.eq.s32.totalorder %s16, 3
      %p58 = por %p56, %p57
      %p59 = scmp.ne.s32.totalorder %s51, %s54
      %p60 = scmp.eq.s32.totalorder %s16, 0
      %p61 = por %p59, %p60
      %p62 = scmp.ne.s32.totalorder %s51, %s54
      %p63 = scmp.eq.s32.totalorder %s21, 3
      %p64 = por %p62, %p63
      %p65 = scmp.ne.s32.totalorder %s54, %s55
      %p66 = scmp.eq.s32.totalorder %s21, 0
      %p67 = por %p65, %p66
      %p68 = scmp.ne.s32.totalorder %s54, %s55
      %p69 = scmp.eq.s32.totalorder %s22, 3
      %p70 = por %p68, %p69
      %p72 = scmp.ne.s32.totalorder %s55, %s71
      %p73 = scmp.eq.s32.totalorder %s22, 0
      %p74 = por %p72, %p73
      %s75 = smul.u32 %s24, 2
      %s76 = sadd.s32 %s75, %s25
      %s77 = smul.u32 %s38, 2
      %s78 = sadd.s32 %s77, %s34
      %s79 = ssub.s32 %s23, %s42
      %s80 = ssub.s32 %s76, %s78
      %s81 = sor.u32 %s79, %s80
      %p82 = scmp.eq.s32.totalorder %s81, 0
      %s84 = sadd.s32 %s83, 1
      %s85 = scalar_select %p82, %s83, %s84
      %p88 = pneg %p82
      %p89 = scmp.eq.s32.totalorder %s16, 3
      %p90 = por %p88, %p89
      %p91 = scmp.ne.s32.totalorder %s83, %s86
      %p92 = scmp.eq.s32.totalorder %s16, 0
      %p93 = por %p91, %p92
      %p94 = scmp.ne.s32.totalorder %s83, %s86
      %p95 = scmp.eq.s32.totalorder %s21, 3
      %p96 = por %p94, %p95
      %p97 = scmp.ne.s32.totalorder %s86, %s87
      %p98 = scmp.eq.s32.totalorder %s21, 0
      %p99 = por %p97, %p98
      %p100 = scmp.ne.s32.totalorder %s86, %s87
      %p101 = scmp.eq.s32.totalorder %s22, 3
      %p102 = por %p100, %p101
      %p104 = scmp.ne.s32.totalorder %s87, %s103
      %p105 = scmp.eq.s32.totalorder %s22, 0
      %p106 = por %p104, %p105
      %s107 = ssub.s32 %s23, %s42
      %s108 = ssub.s32 %s24, %s38
      %s109 = sor.u32 %s107, %s108
      %p110 = scmp.eq.s32.totalorder %s109, 0
      %s112 = sadd.s32 %s111, 1
      %s113 = scalar_select %p110, %s111, %s112
      %p116 = pneg %p110
      %p117 = scmp.eq.s32.totalorder %s16, 3
      %p118 = por %p116, %p117
      %p119 = scmp.ne.s32.totalorder %s111, %s114
      %p120 = scmp.eq.s32.totalorder %s16, 0
      %p121 = por %p119, %p120
      %p122 = scmp.ne.s32.totalorder %s111, %s114
      %p123 = scmp.eq.s32.totalorder %s21, 3
      %p124 = por %p122, %p123
      %p125 = scmp.ne.s32.totalorder %s114, %s115
      %p126 = scmp.eq.s32.totalorder %s21, 0
      %p127 = por %p125, %p126
      %p128 = scmp.ne.s32.totalorder %s114, %s115
      %p129 = scmp.eq.s32.totalorder %s22, 3
      %p130 = por %p128, %p129
      %p132 = scmp.ne.s32.totalorder %s115, %s131
      %p133 = scmp.eq.s32.totalorder %s22, 0
      %p134 = por %p132, %p133
      %s135 = ssub.s32 %s23, %s42
      %s136 = ssub.s32 %s24, %s38
      %s137 = sor.u32 %s135, %s136
      %p138 = scmp.eq.s32.totalorder %s137, 0
      %s140 = sadd.s32 %s139, 1
      %s141 = scalar_select %p138, %s139, %s140
      %p144 = pneg %p138
      %p145 = scmp.eq.s32.totalorder %s16, 3
      %p146 = por %p144, %p145
      %p147 = scmp.ne.s32.totalorder %s139, %s142
      %p148 = scmp.eq.s32.totalorder %s16, 0
      %p149 = por %p147, %p148
      %p150 = scmp.ne.s32.totalorder %s139, %s142
      %p151 = scmp.eq.s32.totalorder %s21, 3
      %p152 = por %p150, %p151
      %p153 = scmp.ne.s32.totalorder %s142, %s143
      %p154 = scmp.eq.s32.totalorder %s21, 0
      %p155 = por %p153, %p154
      %p156 = scmp.ne.s32.totalorder %s142, %s143
      %p157 = scmp.eq.s32.totalorder %s22, 3
      %p158 = por %p156, %p157
      %p160 = scmp.ne.s32.totalorder %s143, %s159
      %p161 = scmp.eq.s32.totalorder %s22, 0
      %p162 = por %p160, %p161
      %p163 = scmp.le.s32.totalorder 1, %s16
      %p164 = scmp.lt.s32.totalorder %s16, 5
      %p165 = pnand %p163, %p164
      %p166 = pneg %p165
      // Predicated region
      $region9: #{tpu_custom_call.1} parent=5 // pred_check
        _
      $region10: #{tpu_custom_call.1} parent=5 // pred_check_branch
        %168 = sbr.rel (%p165) target = $region12
      $region11: #{tpu_custom_call.1} parent=5 // pred_region
        %s169 = ssub.s32 %s16, 1
      $region12: #{tpu_custom_call.1} parent=5 // pred_fallthru
        _
      %p170 = scmp.lt.s32.totalorder %s16, 4
      // Predicated region
      $region13: #{tpu_custom_call.1} parent=5 // pred_check
        %p171 = pneg %p170
      $region14: #{tpu_custom_call.1} parent=5 // pred_check_branch
        %173 = sbr.rel (%p171) target = $region16
      $region15: #{tpu_custom_call.1} parent=5 // pred_region
        // Predicated region
        $region17: #{tpu_custom_call.1} parent=15 // pred_check
          %p174 = pneg %p61
        $region18: #{tpu_custom_call.1} parent=15 // pred_check_branch
          %176 = sbr.rel (%p174) target = $region20
        $region19: #{tpu_custom_call.1} parent=15 // pred_region
          %s177 = sand.u32 %s51, 1
          %s178 = sand.u32 %s51, 1
          %s179 = smul.addr %s178, 16
          %s180 = scalar_lea.vmem [#allocation5], %s179
          %s181 = smul.u32 %s24, 2
          %s182 = sadd.s32 %s181, %s25
          %s183 = smul.addr %s23, 4
          %s184 = sadd.s32 %s182, %s183
          %s185 = smul.addr %s184, 8
          %s186 = scalar_lea.vmem %s0, %s185
          // Predicated region
          $region21: #{tpu_custom_call.1} parent=19 // pred_check
            _
          $region22: #{tpu_custom_call.1} parent=19 // pred_check_branch
            %188 = sbr.rel (0) target = $region24
          $region23: #{tpu_custom_call.1} parent=19 // pred_region
            // Predicated region
            $region25: #{tpu_custom_call.1} parent=23 // pred_check
              _
            $region26: #{tpu_custom_call.1} parent=23 // pred_check_branch
              %190 = sbr.rel (0) target = $region28
            $region27: #{tpu_custom_call.1} parent=23 // pred_region
              // Predicated region
              $region40: #{tpu_custom_call.1} parent=27 // pred_check
                _
              $region41: #{tpu_custom_call.1} parent=27 // pred_check_branch
                %207 = sbr.rel (0) target = $region43
              $region42: #{tpu_custom_call.1} parent=27 // pred_region
                loop: start=0, step=1, limit=1
                $region44: #{tpu_custom_call.1} parent=42 // loop_pre_header
                  _
                $region45: #{tpu_custom_call.1} parent=42 // loop_header
                  %s209 = sphi 0, %s213
                  %p210 = scmp.ge.s32.totalorder %s209, 1
                  %s214 = sphi %s186, %s186
                  %s215 = sphi %s180, %s180
                $region46: #{tpu_custom_call.1} parent=42 // loop_header_branch
                  %212 = sbr.rel (%p210) target = $region50
                $region47: #{tpu_custom_call.1} parent=42 // loop_body
                  %v216 = vld [vmem:[%s214] sm:$0xff]
                  %217 = vst [vmem:[%s215] sm:$0xff] %v216
                  %v218 = vld [vmem:[%s214 + $0x10] sm:$0xff]
                  %219 = vst [vmem:[%s215 + $0x8] sm:$0xff] %v218
                $region48: #{tpu_custom_call.1} parent=42 // loop_footer
                  %s213 = sadd.s32 1, %s209
                $region49: #{tpu_custom_call.1} parent=42 // loop_footer_branch
                  %208 = sbr.rel target = $region45
                $region50: #{tpu_custom_call.1} parent=42 // loop_exit
                  _
              $region43: #{tpu_custom_call.1} parent=27 // pred_fallthru
                _
              // Predicated region
              $region51: #{tpu_custom_call.1} parent=27 // pred_check
                _
              $region52: #{tpu_custom_call.1} parent=27 // pred_check_branch
                %221 = sbr.rel target = $region54
              $region53: #{tpu_custom_call.1} parent=27 // pred_region
                _
              $region54: #{tpu_custom_call.1} parent=27 // pred_fallthru
                _
            $region28: #{tpu_custom_call.1} parent=23 // pred_fallthru
              _
            // Predicated region
            $region29: #{tpu_custom_call.1} parent=23 // pred_check
              _
            $region30: #{tpu_custom_call.1} parent=23 // pred_check_branch
              %192 = sbr.rel target = $region32
            $region31: #{tpu_custom_call.1} parent=23 // pred_region
              loop: start=0, step=1, limit=1
              $region33: #{tpu_custom_call.1} parent=31 // loop_pre_header
                _
              $region34: #{tpu_custom_call.1} parent=31 // loop_header
                %s195 = sphi 0, %s199
                %p196 = scmp.ge.s32.totalorder %s195, 1
                %s200 = sphi %s186, %s186
                %s201 = sphi %s180, %s180
              $region35: #{tpu_custom_call.1} parent=31 // loop_header_branch
                %198 = sbr.rel (%p196) target = $region39
              $region36: #{tpu_custom_call.1} parent=31 // loop_body
                %v202 = vld [vmem:[%s200] sm:$0xff]
                %203 = vst [vmem:[%s201] sm:$0xff] %v202
                %v204 = vld [vmem:[%s200 + $0x10] sm:$0xff]
                %205 = vst [vmem:[%s201 + $0x8] sm:$0xff] %v204
              $region37: #{tpu_custom_call.1} parent=31 // loop_footer
                %s199 = sadd.s32 1, %s195
              $region38: #{tpu_custom_call.1} parent=31 // loop_footer_branch
                %194 = sbr.rel target = $region34
              $region39: #{tpu_custom_call.1} parent=31 // loop_exit
                _
            $region32: #{tpu_custom_call.1} parent=23 // pred_fallthru
              _
          $region24: #{tpu_custom_call.1} parent=19 // pred_fallthru
            _
          %222 = vnop
        $region20: #{tpu_custom_call.1} parent=15 // pred_fallthru
          _
        // Predicated region
        $region55: #{tpu_custom_call.1} parent=15 // pred_check
          %p223 = pneg %p93
        $region56: #{tpu_custom_call.1} parent=15 // pred_check_branch
          %225 = sbr.rel (%p223) target = $region58
        $region57: #{tpu_custom_call.1} parent=15 // pred_region
          %s226 = smul.u32 %s24, 2
          %s227 = sadd.s32 %s226, %s25
          %p228 = scmp.lt.s32.totalorder %s23, 1
          %s229 = scalar_select %p228, %s23, 1
          %p230 = scmp.lt.s32.totalorder %s227, 1
          %s231 = scalar_select %p230, %s227, 1
          %s232 = smul.addr %s229, 2
          %s233 = sadd.s32 %s231, %s232
          %s234 = scalar_lea.vmem %s1, %s233
          %s235 = smul.u32 %s24, 2
          %s236 = sadd.s32 %s235, %s25
        $region58: #{tpu_custom_call.1} parent=15 // pred_fallthru
          _
      $region16: #{tpu_custom_call.1} parent=5 // pred_fallthru
        _
      %p237 = scmp.le.s32.totalorder 1, %s16
      %p238 = scmp.lt.s32.totalorder %s16, 5
      %p239 = pnand %p237, %p238
      %p240 = pneg %p239
      // Predicated region
      $region59: #{tpu_custom_call.1} parent=5 // pred_check
        _
      $region60: #{tpu_custom_call.1} parent=5 // pred_check_branch
        %242 = sbr.rel (%p239) target = $region62
      $region61: #{tpu_custom_call.1} parent=5 // pred_region
        %s243 = ssub.s32 %s16, 1
        %s244 = sand.u32 %s54, 1
        %s245 = sand.u32 %s54, 1
        %s246 = smul.addr %s245, 16
        %s247 = scalar_lea.vmem [#allocation5], %s246
        // Predicated region
        $region63: #{tpu_custom_call.1} parent=61 // pred_check
          %p248 = pneg %p67
        $region64: #{tpu_custom_call.1} parent=61 // pred_check_branch
          %250 = sbr.rel (%p248) target = $region66
        $region65: #{tpu_custom_call.1} parent=61 // pred_region
          _
        $region66: #{tpu_custom_call.1} parent=61 // pred_fallthru
          _
        %s251 = sand.u32 %s54, 1
        %s252 = sand.u32 %s54, 1
        %s253 = smul.addr %s252, 16
        %s254 = scalar_lea.vmem [#allocation5], %s253
        %p255 = pneg %p67
        %p256 = pneg %p64
        %s257 = smul.u32 %s27, 2
        %s258 = sadd.s32 %s257, %s28
        %p259 = scmp.lt.s32.totalorder %s26, 1
        %s260 = scalar_select %p259, %s26, 1
        %p261 = scmp.lt.s32.totalorder %s258, 1
        %s262 = scalar_select %p261, %s258, 1
        %s263 = smul.addr %s260, 2
        %s264 = sadd.s32 %s262, %s263
        %s265 = scalar_lea.vmem %s1, %s264
        %p266 = pneg %p99
        %p267 = pneg %p96
        %p268 = pneg %p127
        %p269 = pneg %p124
        %s270 = sand.u32 %s114, 1
        %s271 = scalar_lea.sflag [#allocation7], %s270
        %s272 = sand.u32 %s114, 1
        %s273 = scalar_lea.vmem [#allocation6], %s272
        %p274 = pneg %p155
        %p275 = pneg %p152
        %s276 = sand.u32 %s142, 1
        %s277 = scalar_lea.sflag [#allocation9], %s276
        %s278 = sand.u32 %s142, 1
        %s279 = scalar_lea.vmem [#allocation8], %s278
        %s280 = smul.u32 %s27, 2
        %s281 = sadd.s32 %s280, %s28
        %s282 = smul.u32 %s27, 2
        %s283 = sadd.s32 %s282, %s28
        %p284 = scmp.lt.s32.totalorder %s26, 1
        %s285 = scalar_select %p284, %s26, 1
        %p286 = scmp.lt.s32.totalorder %s283, 1
        %s287 = scalar_select %p286, %s283, 1
        %s288 = smul.addr %s285, 2
        %s289 = sadd.s32 %s287, %s288
        %s290 = scalar_lea.vmem %s1, %s289
        %s291 = smul.u32 %s27, 2
        %s292 = sadd.s32 %s291, %s28
        %p293 = scmp.eq.s32.totalorder %s28, 0
        // Predicated region
        $region67: #{tpu_custom_call.1} parent=61 // pred_check
          %p294 = pneg %p293
        $region68: #{tpu_custom_call.1} parent=61 // pred_check_branch
          %296 = sbr.rel (%p294) target = $region70
        $region69: #{tpu_custom_call.1} parent=61 // pred_region
          %297 = vst [vmem:[#allocation2] sm:$0x1] 0.0
          %298 = vst [vmem:[#allocation3] sm:$0x1] 0.0
          %v299 = vlaneseq
          %v300 = vshrl.u32 %v299, 7
          %v301 = vadd.s32 %v300, 8
          %302 = vst [vmem:[#allocation4] sm:$0xff] %v300
          %303 = vst [vmem:[#allocation4 + $0x8] sm:$0x3] %v301
        $region70: #{tpu_custom_call.1} parent=61 // pred_fallthru
          _
        %v304 = vld [vmem:[%s247] sm:$0xff]
        %v305 = vld [vmem:[%s247 + $0x8] sm:$0x3]
        %v306 = vld [vmem:[%s290] sm:$0x1]
        %vm307 = vcmask 1041408
        %v308 = vsel %vm307, %v305, -inf
        %v309 = vmax.f32 %v304, %v308
        %v310 = vrot.slane %v309, 4
        %v311 = vmax.f32 %v309, %v310
        %v312 = vrot.slane %v311, 2
        %v313 = vmax.f32 %v311, %v312
        %v314 = vrot.slane %v313, 1
        %v315 = vmax.f32 %v313, %v314
        %v316 = vsub.f32 %v304, %v315
        %v317 = vsub.f32 %v305, %v315
        %v318 = vmul.f32 %v316, 1.442695
        %v319 = vpow.pop %v318
        %v320 = vmul.f32 %v317, 1.442695
        %v321 = vpow.pop %v320
        %v322 = vsel %vm307, %v321, 0.0
        %v323 = vadd.f32 %v319, %v322
        %v324 = vrot.slane %v323, 4
        %v325 = vadd.f32 %v323, %v324
        %v326 = vrot.slane %v325, 2
        %v327 = vadd.f32 %v325, %v326
        %v328 = vrot.slane %v327, 1
        %v329 = vadd.f32 %v327, %v328
        %v330 = vld [vmem:[#allocation4] sm:$0xff]
        %v331 = vld [vmem:[#allocation4 + $0x8] sm:$0x3]
        %v332 = vlaneseq
        %v333 = vshrl.u32 %v332, 7
        %v334 = vsub.s32 0, %v333
        %v335 = vrot.slane %v306, %v334
        %vm336 = vcmp.eq.s32.totalorder %v330, %v335
        %vm337 = vcmp.eq.s32.totalorder %v331, %v335
        %v338 = vsel %vm336, %v316, 0.0
        %v339 = vsel %vm337, %v317, 0.0
        %v340 = vsel %vm307, %v339, 0.0
        %v341 = vadd.f32 %v338, %v340
        %v342 = vrot.slane %v341, 4
        %v343 = vadd.f32 %v341, %v342
        %v344 = vrot.slane %v343, 2
        %v345 = vadd.f32 %v343, %v344
        %v346 = vrot.slane %v345, 1
        %v347 = vadd.f32 %v345, %v346
        %v348 = vlog2.pop %v329
        %v349 = vmul.f32 %v348, 0.6931472
        %v350 = vsub.f32 %v349, %v347
        %vm351 = vcmp.ne.s32.totalorder %v306, 4294967295
        %v352 = vld [vmem:[#allocation2] sm:$0x1]
        %v353 = vsel %vm351, %v350, 0.0
        %v354 = vadd.f32 %v352, %v353
        %355 = vst [vmem:[#allocation2] sm:$0x1] %v354
        %v356 = vld [vmem:[#allocation3] sm:$0x1]
        %v357 = vsel %vm351, 1.0, 0.0
        %v358 = vadd.f32 %v356, %v357
        %359 = vst [vmem:[#allocation3] sm:$0x1] %v358
        %p360 = scmp.eq.s32.totalorder %s28, 1
        // Predicated region
        $region71: #{tpu_custom_call.1} parent=61 // pred_check
          %p361 = pneg %p360
        $region72: #{tpu_custom_call.1} parent=61 // pred_check_branch
          %363 = sbr.rel (%p361) target = $region74
        $region73: #{tpu_custom_call.1} parent=61 // pred_region
          %v364 = vld [vmem:[#allocation2] sm:$0x1]
          %vm365 = vcmask 1040384
          %v366 = vsel %vm365, %v364, 0.0
          %367 = vadd.xlane.f32.xlu0 %v366
          %v368 = vpop.xlane.xlu0 %367
          %v369 = vrot.slane %v368, 4
          %v370 = vadd.f32 %v368, %v369
          %v371 = vrot.slane %v370, 2
          %v372 = vadd.f32 %v370, %v371
          %v373 = vrot.slane %v372, 1
          %v374 = vadd.f32 %v372, %v373
          %s375 = vtos %v374
          %v376 = vld [vmem:[#allocation3] sm:$0x1]
          %v377 = vsel %vm365, %v376, 0.0
          %378 = vadd.xlane.f32.xlu0 %v377
          %v379 = vpop.xlane.xlu0 %378
          %v380 = vrot.slane %v379, 4
          %v381 = vadd.f32 %v379, %v380
          %v382 = vrot.slane %v381, 2
          %v383 = vadd.f32 %v381, %v382
          %v384 = vrot.slane %v383, 1
          %v385 = vadd.f32 %v383, %v384
          %s386 = vtos %v385
          %v387 = vstv %s375
          %388 = vst [vmem:[%s273] sm:$0x1] %v387
          %v389 = vstv %s386
          %390 = vst [vmem:[%s279] sm:$0x1] %v389
        $region74: #{tpu_custom_call.1} parent=61 // pred_fallthru
          _
        %s391 = sand.u32 %s114, 1
        %s392 = scalar_lea.sflag [#allocation7], %s391
        %s393 = sand.u32 %s114, 1
        %s394 = scalar_lea.vmem [#allocation6], %s393
        %s395 = sand.u32 %s142, 1
        %s396 = scalar_lea.sflag [#allocation9], %s395
        %s397 = sand.u32 %s142, 1
        %s398 = scalar_lea.vmem [#allocation8], %s397
        // Predicated region
        $region75: #{tpu_custom_call.1} parent=61 // pred_check
          %p399 = pneg %p124
        $region76: #{tpu_custom_call.1} parent=61 // pred_check_branch
          %401 = sbr.rel (%p399) target = $region78
        $region77: #{tpu_custom_call.1} parent=61 // pred_region
          %s403 = ssub.s32 16, 16
          %404 = vsyncadd %s392, %s403
          %s405 = sadd.s32 %s27, %s26
          %s406 = smul.addr %s405, 16
          %s407 = scalar_lea.hbm %s2, %s406
          %s409 = sshll.u32 %s394, 4
          %s410 = int_to_ptr.vmem [resolvable:$true] %s409
          %412 = dma.vmem_to_hbm [thread:$0]  %s410, 16, %s407, %s392
        $region78: #{tpu_custom_call.1} parent=61 // pred_fallthru
          _
        // Predicated region
        $region79: #{tpu_custom_call.1} parent=61 // pred_check
          %p413 = pneg %p152
        $region80: #{tpu_custom_call.1} parent=61 // pred_check_branch
          %415 = sbr.rel (%p413) target = $region82
        $region81: #{tpu_custom_call.1} parent=61 // pred_region
          %s417 = ssub.s32 16, 16
          %418 = vsyncadd %s396, %s417
          %s419 = sadd.s32 %s27, %s26
          %s420 = smul.addr %s419, 16
          %s421 = scalar_lea.hbm %s3, %s420
          %s423 = sshll.u32 %s398, 4
          %s424 = int_to_ptr.vmem [resolvable:$true] %s423
          %426 = dma.vmem_to_hbm [thread:$0]  %s424, 16, %s421, %s396
        $region82: #{tpu_custom_call.1} parent=61 // pred_fallthru
          _
      $region62: #{tpu_custom_call.1} parent=5 // pred_fallthru
        _
      %p427 = scmp.le.s32.totalorder 2, %s16
      // Predicated region
      $region83: #{tpu_custom_call.1} parent=5 // pred_check
        %p428 = pneg %p427
      $region84: #{tpu_custom_call.1} parent=5 // pred_check_branch
        %430 = sbr.rel (%p428) target = $region86
      $region85: #{tpu_custom_call.1} parent=5 // pred_region
        %s431 = ssub.s32 %s16, 2
        // Predicated region
        $region87: #{tpu_custom_call.1} parent=85 // pred_check
          %p432 = pneg %p130
        $region88: #{tpu_custom_call.1} parent=85 // pred_check_branch
          %434 = sbr.rel (%p432) target = $region90
        $region89: #{tpu_custom_call.1} parent=85 // pred_region
          %s435 = sand.u32 %s115, 1
          %s436 = scalar_lea.sflag [#allocation7], %s435
          %s437 = sand.u32 %s115, 1
          %s438 = scalar_lea.vmem [#allocation6], %s437
          %439 = dma.done %s436, 16
        $region90: #{tpu_custom_call.1} parent=85 // pred_fallthru
          _
        // Predicated region
        $region91: #{tpu_custom_call.1} parent=85 // pred_check
          %p440 = pneg %p158
        $region92: #{tpu_custom_call.1} parent=85 // pred_check_branch
          %442 = sbr.rel (%p440) target = $region94
        $region93: #{tpu_custom_call.1} parent=85 // pred_region
          %s443 = sand.u32 %s143, 1
          %s444 = scalar_lea.sflag [#allocation9], %s443
          %s445 = sand.u32 %s143, 1
          %s446 = scalar_lea.vmem [#allocation8], %s445
          %447 = dma.done %s444, 16
        $region94: #{tpu_custom_call.1} parent=85 // pred_fallthru
          _
      $region86: #{tpu_custom_call.1} parent=5 // pred_fallthru
        _
    $region6: #{tpu_custom_call.1} parent=1 // loop_footer
      %s20 = sadd.s32 1, %s16
    $region7: #{tpu_custom_call.1} parent=1 // loop_footer_branch
      %15 = sbr.rel target = $region3
    $region8: #{tpu_custom_call.1} parent=1 // loop_exit
      _
    %448 = vsyncpa [#allocation7], 1
    %s449 = scalar_lea.sflag [#allocation7], 1
    %450 = vsyncpa %s449, 1
    %451 = vsyncpa [#allocation9], 1
    %s452 = scalar_lea.sflag [#allocation9], 1
    %453 = vsyncpa %s452, 1

</llo_original>
